<compile_context>
chip_gen: v5e
topology: v5e:2x2
jax: 0.10.0
libtpu: 0.0.40
codegen_flags: <defaults>
</compile_context>

<pallas_src>
import jax
import jax.numpy as jnp
from jax import lax
from jax.experimental import pallas as pl
from jax.experimental.pallas import tpu as pltpu


def _make_head_kernel(cin, wp, hwp):
    """Kernel factory; wp = W+2 (padded row width), hwp = H*(W+2)."""
    tap_offsets = [kh * wp + kw for kh in range(3) for kw in range(3)]

    def head_kernel(x_ref, w1_ref, shift_ref, w2_ref, b2_ref, o_ref, slab_ref):
        # x_ref    : (1, Cin, (H+2)*(W+2)+2) bf16  flattened padded image (channel-major)
        # w1_ref   : (Cint, 9*Cin)           bf16  3x3 weights, BN scale pre-folded
        # shift_ref: (Cint, 1)               f32   BN shift = beta - mean*scale
        # w2_ref   : (Cout, Cint)            f32   1x1 conv weights
        # b2_ref   : (Cout, 1)               f32   1x1 conv bias
        # o_ref    : (1, Cout, H*(W+2))      f32
        # slab_ref : (9*Cin, H*(W+2))        bf16  VMEM scratch (in-kernel im2col)
        x = x_ref[0]                                     # (Cin, Np2)
        for t, off in enumerate(tap_offsets):            # 9 lane-shifted tap slices
            slab_ref[t * cin:(t + 1) * cin, :] = x[:, off:off + hwp]
        y = jnp.dot(w1_ref[...], slab_ref[...],
                    preferred_element_type=jnp.float32)  # fused K=9*Cin matmul
        y = jnp.maximum(y + shift_ref[...], 0.0)         # BN shift + ReLU
        # TODO(synk): Dropout(0.1) is identity in eval mode; training-mode masking
        # (pltpu.prng_seed / prng_random_bits with 1/(1-p) scaling) not implemented.
        out = jnp.dot(w2_ref[...], y, preferred_element_type=jnp.float32)
        o_ref[0] = (out + b2_ref[...]).astype(o_ref.dtype)

    return head_kernel


def _vmem_limit_bytes():
    """Half of physical VMEM, capped at 64 MiB (64 MiB on v5e/v6e, 32 MiB on v7x)."""
    try:
        cap = pltpu.get_tpu_info().vmem_capacity_bytes
    except Exception:
        cap = 64 * 1024 * 1024
    return max(min(cap // 2, 64 * 1024 * 1024), 16 * 1024 * 1024)


def _check_vmem(cin, cout, k9, np2, hwp, limit):
    pad128 = lambda n: -(-n // 128) * 128
    need = (2 * cin * pad128(np2) * 2          # double-buffered bf16 input block
            + k9 * pad128(hwp) * 2             # bf16 patch-slab scratch
            + 2 * cout * pad128(hwp) * 4)      # double-buffered f32 output block
    if need > limit:
        # TODO(synk): very large H*W needs a row-tiled (halo) variant of this
        # kernel; not required at the demo shapes.
        raise ValueError(
            f"Head kernel per-step VMEM footprint {need} B exceeds limit {limit} B")


def head_forward(x_nchw, w1, gamma, beta, run_mean, run_var, w2, b2, eps=1e-5):
    """x_nchw: (B, Cin, H, W) float32.  Returns (B, Cout, H, W) float32."""
    B, Cin, H, W = x_nchw.shape
    Cint = w1.shape[0]
    Cout = w2.shape[0]
    Wp = W + 2
    Np = (H + 2) * Wp
    HWp = H * Wp                 # output columns per image (width-padded grid)
    Np2 = Np + 2                 # +2 tail so the last (kh=2,kw=2) tap slice stays in bounds
    K9 = 9 * Cin

    # glue: pad once, flatten channel-major, stream the big operand in bf16
    xp = jnp.pad(x_nchw, ((0, 0), (0, 0), (1, 1), (1, 1)))
    xpf = jnp.pad(xp.reshape(B, Cin, Np), ((0, 0), (0, 0), (0, Np2 - Np)))
    xpf = xpf.astype(jnp.bfloat16)

    # glue: fold BN running stats (eval mode) into the 3x3 conv weights
    scale = gamma / jnp.sqrt(run_var + eps)                          # (Cint,)
    shift = (beta - run_mean * scale).reshape(Cint, 1).astype(jnp.float32)
    # weight rows ordered (kh, kw, cin) to match the kernel's tap offsets
    w1rows = jnp.transpose(w1, (2, 3, 1, 0)).reshape(K9, Cint) * scale[None, :]
    w1t = jnp.transpose(w1rows, (1, 0)).astype(jnp.bfloat16)         # (Cint, 9*Cin)
    w2t = w2.reshape(Cout, Cint).astype(jnp.float32)
    b2c = b2.reshape(Cout, 1).astype(jnp.float32)

    vmem_limit = _vmem_limit_bytes()
    _check_vmem(Cin, Cout, K9, Np2, HWp, vmem_limit)

    flops = 2 * B * HWp * (K9 * Cint + Cint * Cout)
    bytes_accessed = (2 * B * Cin * Np2 + 4 * B * Cout * HWp
                      + 2 * Cint * K9 + 4 * (Cint + Cout * Cint + Cout))

    out_flat = pl.pallas_call(
        _make_head_kernel(Cin, Wp, HWp),
        out_shape=jax.ShapeDtypeStruct((B, Cout, HWp), jnp.float32),
        grid_spec=pltpu.PrefetchScalarGridSpec(
            num_scalar_prefetch=0,
            grid=(B,),
            in_specs=[
                pl.BlockSpec((1, Cin, Np2), lambda b: (b, 0, 0)),
                pl.BlockSpec((Cint, K9), lambda b: (0, 0)),
                pl.BlockSpec((Cint, 1), lambda b: (0, 0)),
                pl.BlockSpec((Cout, Cint), lambda b: (0, 0)),
                pl.BlockSpec((Cout, 1), lambda b: (0, 0)),
            ],
            out_specs=pl.BlockSpec((1, Cout, HWp), lambda b: (b, 0, 0)),
            scratch_shapes=[pltpu.VMEM((K9, HWp), jnp.bfloat16)],
        ),
        compiler_params=pltpu.CompilerParams(
            dimension_semantics=("parallel",),     # batch steps -> both TCs on v7x
            vmem_limit_bytes=vmem_limit),
        cost_estimate=pl.CostEstimate(flops=flops, transcendentals=0,
                                      bytes_accessed=bytes_accessed),
    )(xpf, w1t, shift, w2t, b2c)

    # glue: drop the 2 junk columns per row and return NCHW (reshape + slice only,
    # no transpose copy)
    return out_flat.reshape(B, Cout, H, Wp)[:, :, :, :W]


def head_reference(x_nchw, w1, gamma, beta, run_mean, run_var, w2, b2, eps=1e-5):
    """Pure-JAX reference (lax.conv) for correctness checking."""
    y = lax.conv_general_dilated(
        x_nchw, w1, window_strides=(1, 1), padding=((1, 1), (1, 1)),
        dimension_numbers=("NCHW", "OIHW", "NCHW"))
    scale = gamma / jnp.sqrt(run_var + eps)
    shift = beta - run_mean * scale
    y = y * scale[None, :, None, None] + shift[None, :, None, None]
    y = jnp.maximum(y, 0.0)
    y = lax.conv_general_dilated(
        y, w2, window_strides=(1, 1), padding=((0, 0), (0, 0)),
        dimension_numbers=("NCHW", "OIHW", "NCHW"))
    return y + b2[None, :, None, None]


if __name__ == "__main__":
    # Shapes consistent with Head(in_channels=16, out_channels=8)
    B, Cin, H, W = 2, 16, 16, 16
    Cint = Cin // 4          # 4
    Cout = 8

    key = jax.random.PRNGKey(0)
    k_x, k_w1, k_g, k_b, k_m, k_v, k_w2, k_b2 = jax.random.split(key, 8)

    x = jax.random.normal(k_x, (B, Cin, H, W), dtype=jnp.float32)
    w1 = jax.random.normal(k_w1, (Cint, Cin, 3, 3), dtype=jnp.float32) * 0.1
    gamma = jax.random.normal(k_g, (Cint,), dtype=jnp.float32) * 0.1 + 1.0
    beta = jax.random.normal(k_b, (Cint,), dtype=jnp.float32) * 0.1
    run_mean = jax.random.normal(k_m, (Cint,), dtype=jnp.float32) * 0.1
    run_var = jax.random.uniform(k_v, (Cint,), dtype=jnp.float32,
                                 minval=0.5, maxval=1.5)
    w2 = jax.random.normal(k_w2, (Cout, Cint, 1, 1), dtype=jnp.float32) * 0.1
    b2 = jax.random.normal(k_b2, (Cout,), dtype=jnp.float32) * 0.1

    out = head_forward(x, w1, gamma, beta, run_mean, run_var, w2, b2)
    out = jax.block_until_ready(out)

    ref = head_reference(x, w1, gamma, beta, run_mean, run_var, w2, b2)
    ref = jax.block_until_ready(ref)

    assert out.shape == (B, Cout, H, W), out.shape
    max_err = float(jnp.max(jnp.abs(out - ref)))
    # bf16 streaming of the dominant operand (f32 accumulate) -> ~1e-2 level error
    assert jnp.allclose(out, ref, atol=2e-2, rtol=2e-2), max_err

    print("KERNEL_OK")
</pallas_src>

<mosaic_0001>
module attributes {stable_mosaic.version = 11 : i64} {
  func.func @head_kernel(%arg0: i32, %arg1: memref<1x16x326xbf16, #tpu.memory_space<vmem>>, %arg2: memref<4x144xbf16, #tpu.memory_space<vmem>>, %arg3: memref<4x1xf32, #tpu.memory_space<vmem>>, %arg4: memref<8x4xf32, #tpu.memory_space<vmem>>, %arg5: memref<8x1xf32, #tpu.memory_space<vmem>>, %arg6: memref<1x8x288xf32, #tpu.memory_space<vmem>>, %arg7: memref<144x288xbf16, #tpu.memory_space<vmem>>) attributes {dimension_semantics = [#tpu.dimension_semantics<parallel>], iteration_bounds = array<i64: 2>, scalar_prefetch = 0 : i64, scratch_operands = 1 : i64, tpu.core_type = #tpu.core_type<tc>, window_params = [{transform_indices = @transform_0, window_bounds = array<i64: 1, 16, 326>}, {pipeline_mode = #tpu.pipeline_mode<synchronous>, transform_indices = @transform_1, window_bounds = array<i64: 4, 144>}, {pipeline_mode = #tpu.pipeline_mode<synchronous>, transform_indices = @transform_2, window_bounds = array<i64: 4, 1>}, {pipeline_mode = #tpu.pipeline_mode<synchronous>, transform_indices = @transform_3, window_bounds = array<i64: 8, 4>}, {pipeline_mode = #tpu.pipeline_mode<synchronous>, transform_indices = @transform_4, window_bounds = array<i64: 8, 1>}, {transform_indices = @transform_5, window_bounds = array<i64: 1, 8, 288>}]} {
    %c0 = arith.constant 0 : index
    %c0_0 = arith.constant 0 : index
    %c0_1 = arith.constant 0 : index
    %0 = vector.load %arg1[%c0, %c0_0, %c0_1] : memref<1x16x326xbf16, #tpu.memory_space<vmem>>, vector<1x16x326xbf16>
    %1 = vector.shape_cast %0 : vector<1x16x326xbf16> to vector<16x326xbf16>
    %2 = vector.extract_strided_slice %1 {offsets = [0, 0], sizes = [16, 288], strides = [1, 1]} : vector<16x326xbf16> to vector<16x288xbf16>
    %c0_2 = arith.constant 0 : index
    %c0_3 = arith.constant 0 : index
    %3 = vector.load %arg7[%c0_2, %c0_3] : memref<144x288xbf16, #tpu.memory_space<vmem>>, vector<16x288xbf16>
    tpu.vector_store %arg7[%c0_2, %c0_3], %2 {strides = array<i32>} : memref<144x288xbf16, #tpu.memory_space<vmem>>, vector<16x288xbf16>,
    %4 = vector.extract_strided_slice %1 {offsets = [0, 1], sizes = [16, 288], strides = [1, 1]} : vector<16x326xbf16> to vector<16x288xbf16>
    %c16 = arith.constant 16 : index
    %c0_4 = arith.constant 0 : index
    %5 = vector.load %arg7[%c16, %c0_4] : memref<144x288xbf16, #tpu.memory_space<vmem>>, vector<16x288xbf16>
    tpu.vector_store %arg7[%c16, %c0_4], %4 {strides = array<i32>} : memref<144x288xbf16, #tpu.memory_space<vmem>>, vector<16x288xbf16>,
    %6 = vector.extract_strided_slice %1 {offsets = [0, 2], sizes = [16, 288], strides = [1, 1]} : vector<16x326xbf16> to vector<16x288xbf16>
    %c32 = arith.constant 32 : index
    %c0_5 = arith.constant 0 : index
    %7 = vector.load %arg7[%c32, %c0_5] : memref<144x288xbf16, #tpu.memory_space<vmem>>, vector<16x288xbf16>
    tpu.vector_store %arg7[%c32, %c0_5], %6 {strides = array<i32>} : memref<144x288xbf16, #tpu.memory_space<vmem>>, vector<16x288xbf16>,
    %8 = vector.extract_strided_slice %1 {offsets = [0, 18], sizes = [16, 288], strides = [1, 1]} : vector<16x326xbf16> to vector<16x288xbf16>
    %c48 = arith.constant 48 : index
    %c0_6 = arith.constant 0 : index
    %9 = vector.load %arg7[%c48, %c0_6] : memref<144x288xbf16, #tpu.memory_space<vmem>>, vector<16x288xbf16>
    tpu.vector_store %arg7[%c48, %c0_6], %8 {strides = array<i32>} : memref<144x288xbf16, #tpu.memory_space<vmem>>, vector<16x288xbf16>,
    %10 = vector.extract_strided_slice %1 {offsets = [0, 19], sizes = [16, 288], strides = [1, 1]} : vector<16x326xbf16> to vector<16x288xbf16>
    %c64 = arith.constant 64 : index
    %c0_7 = arith.constant 0 : index
    %11 = vector.load %arg7[%c64, %c0_7] : memref<144x288xbf16, #tpu.memory_space<vmem>>, vector<16x288xbf16>
    tpu.vector_store %arg7[%c64, %c0_7], %10 {strides = array<i32>} : memref<144x288xbf16, #tpu.memory_space<vmem>>, vector<16x288xbf16>,
    %12 = vector.extract_strided_slice %1 {offsets = [0, 20], sizes = [16, 288], strides = [1, 1]} : vector<16x326xbf16> to vector<16x288xbf16>
    %c80 = arith.constant 80 : index
    %c0_8 = arith.constant 0 : index
    %13 = vector.load %arg7[%c80, %c0_8] : memref<144x288xbf16, #tpu.memory_space<vmem>>, vector<16x288xbf16>
    tpu.vector_store %arg7[%c80, %c0_8], %12 {strides = array<i32>} : memref<144x288xbf16, #tpu.memory_space<vmem>>, vector<16x288xbf16>,
    %14 = vector.extract_strided_slice %1 {offsets = [0, 36], sizes = [16, 288], strides = [1, 1]} : vector<16x326xbf16> to vector<16x288xbf16>
    %c96 = arith.constant 96 : index
    %c0_9 = arith.constant 0 : index
    %15 = vector.load %arg7[%c96, %c0_9] : memref<144x288xbf16, #tpu.memory_space<vmem>>, vector<16x288xbf16>
    tpu.vector_store %arg7[%c96, %c0_9], %14 {strides = array<i32>} : memref<144x288xbf16, #tpu.memory_space<vmem>>, vector<16x288xbf16>,
    %16 = vector.extract_strided_slice %1 {offsets = [0, 37], sizes = [16, 288], strides = [1, 1]} : vector<16x326xbf16> to vector<16x288xbf16>
    %c112 = arith.constant 112 : index
    %c0_10 = arith.constant 0 : index
    %17 = vector.load %arg7[%c112, %c0_10] : memref<144x288xbf16, #tpu.memory_space<vmem>>, vector<16x288xbf16>
    tpu.vector_store %arg7[%c112, %c0_10], %16 {strides = array<i32>} : memref<144x288xbf16, #tpu.memory_space<vmem>>, vector<16x288xbf16>,
    %18 = vector.extract_strided_slice %1 {offsets = [0, 38], sizes = [16, 288], strides = [1, 1]} : vector<16x326xbf16> to vector<16x288xbf16>
    %c128 = arith.constant 128 : index
    %c0_11 = arith.constant 0 : index
    %19 = vector.load %arg7[%c128, %c0_11] : memref<144x288xbf16, #tpu.memory_space<vmem>>, vector<16x288xbf16>
    tpu.vector_store %arg7[%c128, %c0_11], %18 {strides = array<i32>} : memref<144x288xbf16, #tpu.memory_space<vmem>>, vector<16x288xbf16>,
    %c0_12 = arith.constant 0 : index
    %c0_13 = arith.constant 0 : index
    %20 = vector.load %arg2[%c0_12, %c0_13] : memref<4x144xbf16, #tpu.memory_space<vmem>>, vector<4x144xbf16>
    %c0_14 = arith.constant 0 : index
    %c0_15 = arith.constant 0 : index
    %21 = vector.load %arg7[%c0_14, %c0_15] : memref<144x288xbf16, #tpu.memory_space<vmem>>, vector<144x288xbf16>
    %cst = arith.constant dense<0.000000e+00> : vector<4x288xf32>
    %22 = tpu.matmul %20, %21, %cst {dimension_numbers = #tpu.dot_dimension_numbers<[1], [0], [0], [1], [0, 0, 1, 1], [], []>} : vector<4x144xbf16>, vector<144x288xbf16>, vector<4x288xf32> -> vector<4x288xf32>
    %c0_16 = arith.constant 0 : index
    %c0_17 = arith.constant 0 : index
    %23 = vector.load %arg3[%c0_16, %c0_17] : memref<4x1xf32, #tpu.memory_space<vmem>>, vector<4x1xf32>
    %24 = vector.broadcast %23 : vector<4x1xf32> to vector<4x288xf32>
    %25 = arith.addf %22, %24 : vector<4x288xf32>
    %cst_18 = arith.constant 0.000000e+00 : f32
    %26 = vector.broadcast %cst_18 : f32 to vector<4x288xf32>
    %27 = arith.maximumf %25, %26 : vector<4x288xf32>
    %c0_19 = arith.constant 0 : index
    %c0_20 = arith.constant 0 : index
    %28 = vector.load %arg4[%c0_19, %c0_20] : memref<8x4xf32, #tpu.memory_space<vmem>>, vector<8x4xf32>
    %cst_21 = arith.constant dense<0.000000e+00> : vector<8x288xf32>
    %29 = tpu.matmul %28, %27, %cst_21 {dimension_numbers = #tpu.dot_dimension_numbers<[1], [0], [0], [1], [0, 0, 1, 1], [], []>} : vector<8x4xf32>, vector<4x288xf32>, vector<8x288xf32> -> vector<8x288xf32>
    %c0_22 = arith.constant 0 : index
    %c0_23 = arith.constant 0 : index
    %30 = vector.load %arg5[%c0_22, %c0_23] : memref<8x1xf32, #tpu.memory_space<vmem>>, vector<8x1xf32>
    %31 = vector.broadcast %30 : vector<8x1xf32> to vector<8x288xf32>
    %32 = arith.addf %29, %31 : vector<8x288xf32>
    %c0_24 = arith.constant 0 : index
    %c0_25 = arith.constant 0 : index
    %c0_26 = arith.constant 0 : index
    %33 = vector.load %arg6[%c0_24, %c0_25, %c0_26] : memref<1x8x288xf32, #tpu.memory_space<vmem>>, vector<1x8x288xf32>
    %34 = vector.shape_cast %33 : vector<1x8x288xf32> to vector<8x288xf32>
    %35 = vector.shape_cast %32 : vector<8x288xf32> to vector<1x8x288xf32>
    tpu.vector_store %arg6[%c0_24, %c0_25, %c0_26], %35 {strides = array<i32>} : memref<1x8x288xf32, #tpu.memory_space<vmem>>, vector<1x8x288xf32>,
    return
  }
  func.func @transform_0(%arg0: i32) -> (i32, i32, i32) {
    %c0_i32 = arith.constant 0 : i32
    %c0_i32_0 = arith.constant 0 : i32
    %c0_i32_1 = arith.constant 0 : i32
    return %arg0, %c0_i32, %c0_i32_0 : i32, i32, i32
  }
  func.func @transform_1(%arg0: i32) -> (i32, i32) {
    %c0_i32 = arith.constant 0 : i32
    %c0_i32_0 = arith.constant 0 : i32
    %c0_i32_1 = arith.constant 0 : i32
    return %c0_i32, %c0_i32_0 : i32, i32
  }
  func.func @transform_2(%arg0: i32) -> (i32, i32) {
    %c0_i32 = arith.constant 0 : i32
    %c0_i32_0 = arith.constant 0 : i32
    %c0_i32_1 = arith.constant 0 : i32
    return %c0_i32, %c0_i32_0 : i32, i32
  }
  func.func @transform_3(%arg0: i32) -> (i32, i32) {
    %c0_i32 = arith.constant 0 : i32
    %c0_i32_0 = arith.constant 0 : i32
    %c0_i32_1 = arith.constant 0 : i32
    return %c0_i32, %c0_i32_0 : i32, i32
  }
  func.func @transform_4(%arg0: i32) -> (i32, i32) {
    %c0_i32 = arith.constant 0 : i32
    %c0_i32_0 = arith.constant 0 : i32
    %c0_i32_1 = arith.constant 0 : i32
    return %c0_i32, %c0_i32_0 : i32, i32
  }
  func.func @transform_5(%arg0: i32) -> (i32, i32, i32) {
    %c0_i32 = arith.constant 0 : i32
    %c0_i32_0 = arith.constant 0 : i32
    %c0_i32_1 = arith.constant 0 : i32
    return %arg0, %c0_i32, %c0_i32_0 : i32, i32, i32
  }
}

</mosaic_0001>

<llo_original>
// kernel: tpu_custom_call.1
$region0: #{tpu_custom_call.1}
  #allocation0 [shape = 'u32[]', space=smem, size = 0x4, offset = 0x4, fixed_abs, tag = 'smem constant byte address 0x4 - core index']
  #allocation1 [shape = 'u32[72,128]{1,0:T(1,128)}', space=vmem, size = 0x9000, scoped, tag = 'internal scratch']
  #allocation2 [shape = 'bf16[144,288]{1,0:T(8,128)(2,1)}', space=vmem, size = 0x1b000, scoped, tag = 'scratch operand']
  %s0 = inlined_call_operand.hbm [shape: bf16[2,16,326], index: 0, kind: input, shape index: {}]
  %s1 = inlined_call_operand.vmem [shape: bf16[4,144], index: 1, kind: input, shape index: {}]
  %s2 = inlined_call_operand.vmem [shape: f32[4,1], index: 2, kind: input, shape index: {}]
  %s3 = inlined_call_operand.vmem [shape: f32[8,4], index: 3, kind: input, shape index: {}]
  %s4 = inlined_call_operand.vmem [shape: f32[8,1], index: 4, kind: input, shape index: {}]
  %s5 = inlined_call_operand.hbm [shape: f32[2,8,288], index: 5, kind: output, shape index: {}]
  %s6 = sld [smem:[#allocation0]]
  $region57: #{tpu_custom_call.1} parent=0
    _
  %s8 = ssub.s32 1, %s6
  %s9 = scalar_select 0, %s8, %s6
  $region1: #{tpu_custom_call.1} parent=0
    #allocation3 [shape = 'u8[24576]{0}', space=vmem, size = 0x6000, scoped, tag = 'input window, operand 0']
    #allocation4 [shape = 's32[2]{0}', space=sflag, size = 0x8, scoped, tag = 'scoped memory for tpu_custom_call.1']
    #allocation5 [shape = 's32[2]{0}', space=sflag, size = 0x8, scoped, tag = 'scoped memory for tpu_custom_call.1']
    #allocation6 [shape = 'u8[24576]{0}', space=vmem, size = 0x6000, scoped, tag = 'output window, operand 0']
    %10 = vsyncpa [#allocation4], 0
    %s11 = scalar_lea.sflag [#allocation4], 1
    %12 = vsyncpa %s11, 0
    %13 = vsyncpa [#allocation5], 0
    %s14 = scalar_lea.sflag [#allocation5], 1
    %15 = vsyncpa %s14, 0
    loop: start=0, step=1, limit=4
    $region2: #{tpu_custom_call.1} parent=1 // loop_pre_header
      _
    $region3: #{tpu_custom_call.1} parent=1 // loop_header
      %s17 = sphi 0, %s21
      %p18 = scmp.ge.s32.totalorder %s17, 4
      %s27 = sphi 0, %s29
      %s30 = sphi 0, %s27
      %s31 = sphi 0, %s30
      %s47 = sphi 0, %s31
      %s51 = sphi 0, %s51
      %s53 = sphi 0, %s51
      %s54 = sphi 0, %s53
      %s68 = sphi 0, %s54
      %s72 = sphi 0, %s72
      %s74 = sphi 0, %s72
      %s75 = sphi 0, %s74
      %s89 = sphi 0, %s75
      %s93 = sphi 0, %s93
      %s95 = sphi 0, %s93
      %s96 = sphi 0, %s95
      %s110 = sphi 0, %s96
      %s114 = sphi 0, %s114
      %s116 = sphi 0, %s114
      %s117 = sphi 0, %s116
      %s131 = sphi 0, %s117
      %s137 = sphi 0, %s139
      %s140 = sphi 0, %s137
      %s141 = sphi 0, %s140
      %s157 = sphi 0, %s141
    $region4: #{tpu_custom_call.1} parent=1 // loop_header_branch
      %20 = sbr.rel (%p18) target = $region8
    $region5: #{tpu_custom_call.1} parent=1 // loop_body
      %s22 = ssub.s32 %s17, 1
      %s23 = ssub.s32 %s17, 2
      %s24 = sadd.s32 %s17, 1
      %s25 = ssub.s32 %s17, %s24
      %p26 = scmp.eq.s32.totalorder %s25, 0
      %s28 = sadd.s32 %s27, 1
      %s29 = scalar_select %p26, %s27, %s28
      %p32 = pneg %p26
      %p33 = scmp.eq.s32.totalorder %s17, 1
      %p34 = por %p32, %p33
      %p35 = scmp.ne.s32.totalorder %s27, %s30
      %p36 = scmp.eq.s32.totalorder %s17, 0
      %p37 = por %p35, %p36
      %p38 = scmp.ne.s32.totalorder %s27, %s30
      %p39 = scmp.eq.s32.totalorder %s22, 1
      %p40 = por %p38, %p39
      %p41 = scmp.ne.s32.totalorder %s30, %s31
      %p42 = scmp.eq.s32.totalorder %s22, 0
      %p43 = por %p41, %p42
      %p44 = scmp.ne.s32.totalorder %s30, %s31
      %p45 = scmp.eq.s32.totalorder %s23, 1
      %p46 = por %p44, %p45
      %p48 = scmp.ne.s32.totalorder %s31, %s47
      %p49 = scmp.eq.s32.totalorder %s23, 0
      %p50 = por %p48, %p49
      %s52 = sadd.s32 %s51, 1
      %p55 = scmp.eq.s32.totalorder %s17, 1
      %p56 = scmp.ne.s32.totalorder %s51, %s53
      %p57 = scmp.eq.s32.totalorder %s17, 0
      %p58 = por %p56, %p57
      %p59 = scmp.ne.s32.totalorder %s51, %s53
      %p60 = scmp.eq.s32.totalorder %s22, 1
      %p61 = por %p59, %p60
      %p62 = scmp.ne.s32.totalorder %s53, %s54
      %p63 = scmp.eq.s32.totalorder %s22, 0
      %p64 = por %p62, %p63
      %p65 = scmp.ne.s32.totalorder %s53, %s54
      %p66 = scmp.eq.s32.totalorder %s23, 1
      %p67 = por %p65, %p66
      %p69 = scmp.ne.s32.totalorder %s54, %s68
      %p70 = scmp.eq.s32.totalorder %s23, 0
      %p71 = por %p69, %p70
      %s73 = sadd.s32 %s72, 1
      %p76 = scmp.eq.s32.totalorder %s17, 1
      %p77 = scmp.ne.s32.totalorder %s72, %s74
      %p78 = scmp.eq.s32.totalorder %s17, 0
      %p79 = por %p77, %p78
      %p80 = scmp.ne.s32.totalorder %s72, %s74
      %p81 = scmp.eq.s32.totalorder %s22, 1
      %p82 = por %p80, %p81
      %p83 = scmp.ne.s32.totalorder %s74, %s75
      %p84 = scmp.eq.s32.totalorder %s22, 0
      %p85 = por %p83, %p84
      %p86 = scmp.ne.s32.totalorder %s74, %s75
      %p87 = scmp.eq.s32.totalorder %s23, 1
      %p88 = por %p86, %p87
      %p90 = scmp.ne.s32.totalorder %s75, %s89
      %p91 = scmp.eq.s32.totalorder %s23, 0
      %p92 = por %p90, %p91
      %s94 = sadd.s32 %s93, 1
      %p97 = scmp.eq.s32.totalorder %s17, 1
      %p98 = scmp.ne.s32.totalorder %s93, %s95
      %p99 = scmp.eq.s32.totalorder %s17, 0
      %p100 = por %p98, %p99
      %p101 = scmp.ne.s32.totalorder %s93, %s95
      %p102 = scmp.eq.s32.totalorder %s22, 1
      %p103 = por %p101, %p102
      %p104 = scmp.ne.s32.totalorder %s95, %s96
      %p105 = scmp.eq.s32.totalorder %s22, 0
      %p106 = por %p104, %p105
      %p107 = scmp.ne.s32.totalorder %s95, %s96
      %p108 = scmp.eq.s32.totalorder %s23, 1
      %p109 = por %p107, %p108
      %p111 = scmp.ne.s32.totalorder %s96, %s110
      %p112 = scmp.eq.s32.totalorder %s23, 0
      %p113 = por %p111, %p112
      %s115 = sadd.s32 %s114, 1
      %p118 = scmp.eq.s32.totalorder %s17, 1
      %p119 = scmp.ne.s32.totalorder %s114, %s116
      %p120 = scmp.eq.s32.totalorder %s17, 0
      %p121 = por %p119, %p120
      %p122 = scmp.ne.s32.totalorder %s114, %s116
      %p123 = scmp.eq.s32.totalorder %s22, 1
      %p124 = por %p122, %p123
      %p125 = scmp.ne.s32.totalorder %s116, %s117
      %p126 = scmp.eq.s32.totalorder %s22, 0
      %p127 = por %p125, %p126
      %p128 = scmp.ne.s32.totalorder %s116, %s117
      %p129 = scmp.eq.s32.totalorder %s23, 1
      %p130 = por %p128, %p129
      %p132 = scmp.ne.s32.totalorder %s117, %s131
      %p133 = scmp.eq.s32.totalorder %s23, 0
      %p134 = por %p132, %p133
      %s135 = ssub.s32 %s17, %s24
      %p136 = scmp.eq.s32.totalorder %s135, 0
      %s138 = sadd.s32 %s137, 1
      %s139 = scalar_select %p136, %s137, %s138
      %p142 = pneg %p136
      %p143 = scmp.eq.s32.totalorder %s17, 1
      %p144 = por %p142, %p143
      %p145 = scmp.ne.s32.totalorder %s137, %s140
      %p146 = scmp.eq.s32.totalorder %s17, 0
      %p147 = por %p145, %p146
      %p148 = scmp.ne.s32.totalorder %s137, %s140
      %p149 = scmp.eq.s32.totalorder %s22, 1
      %p150 = por %p148, %p149
      %p151 = scmp.ne.s32.totalorder %s140, %s141
      %p152 = scmp.eq.s32.totalorder %s22, 0
      %p153 = por %p151, %p152
      %p154 = scmp.ne.s32.totalorder %s140, %s141
      %p155 = scmp.eq.s32.totalorder %s23, 1
      %p156 = por %p154, %p155
      %p158 = scmp.ne.s32.totalorder %s141, %s157
      %p159 = scmp.eq.s32.totalorder %s23, 0
      %p160 = por %p158, %p159
      %p161 = scmp.le.s32.totalorder 1, %s17
      %p162 = scmp.lt.s32.totalorder %s17, 3
      %p163 = pnand %p161, %p162
      %p164 = pneg %p163
      // Predicated region
      $region9: #{tpu_custom_call.1} parent=5 // pred_check
        _
      $region10: #{tpu_custom_call.1} parent=5 // pred_check_branch
        %166 = sbr.rel (%p163) target = $region12
      $region11: #{tpu_custom_call.1} parent=5 // pred_region
        %s167 = ssub.s32 %s17, 1
        // Predicated region
        $region13: #{tpu_custom_call.1} parent=11 // pred_check
          %p168 = pneg %p64
        $region14: #{tpu_custom_call.1} parent=11 // pred_check_branch
          %170 = sbr.rel (%p168) target = $region16
        $region15: #{tpu_custom_call.1} parent=11 // pred_region
          _
        $region16: #{tpu_custom_call.1} parent=11 // pred_fallthru
          _
        // Predicated region
        $region17: #{tpu_custom_call.1} parent=11 // pred_check
          %p171 = pneg %p85
        $region18: #{tpu_custom_call.1} parent=11 // pred_check_branch
          %173 = sbr.rel (%p171) target = $region20
        $region19: #{tpu_custom_call.1} parent=11 // pred_region
          _
        $region20: #{tpu_custom_call.1} parent=11 // pred_fallthru
          _
        // Predicated region
        $region21: #{tpu_custom_call.1} parent=11 // pred_check
          %p174 = pneg %p106
        $region22: #{tpu_custom_call.1} parent=11 // pred_check_branch
          %176 = sbr.rel (%p174) target = $region24
        $region23: #{tpu_custom_call.1} parent=11 // pred_region
          _
        $region24: #{tpu_custom_call.1} parent=11 // pred_fallthru
          _
        // Predicated region
        $region25: #{tpu_custom_call.1} parent=11 // pred_check
          %p177 = pneg %p127
        $region26: #{tpu_custom_call.1} parent=11 // pred_check_branch
          %179 = sbr.rel (%p177) target = $region28
        $region27: #{tpu_custom_call.1} parent=11 // pred_region
          _
        $region28: #{tpu_custom_call.1} parent=11 // pred_fallthru
          _
      $region12: #{tpu_custom_call.1} parent=5 // pred_fallthru
        _
      %p180 = scmp.lt.s32.totalorder %s17, 2
      // Predicated region
      $region29: #{tpu_custom_call.1} parent=5 // pred_check
        %p181 = pneg %p180
      $region30: #{tpu_custom_call.1} parent=5 // pred_check_branch
        %183 = sbr.rel (%p181) target = $region32
      $region31: #{tpu_custom_call.1} parent=5 // pred_region
        // Predicated region
        $region33: #{tpu_custom_call.1} parent=31 // pred_check
          %p184 = pneg %p37
        $region34: #{tpu_custom_call.1} parent=31 // pred_check_branch
          %186 = sbr.rel (%p184) target = $region36
        $region35: #{tpu_custom_call.1} parent=31 // pred_region
          %s187 = sand.u32 %s27, 1
          %s188 = scalar_lea.sflag [#allocation4], %s187
          %s189 = sand.u32 %s27, 1
          %s190 = smul.addr %s189, 24
          %s191 = scalar_lea.vmem [#allocation3], %s190
          %193 = vsyncadd %s188, 0
          %s194 = smul.addr %s17, 6
          %s195 = smul.addr %s194, 4
          %s196 = scalar_lea.hbm %s0, %s195
          %s197 = sshll.u32 %s196, 4
          %s198 = int_to_ptr.hbm [resolvable:$true] %s197
          %s199 = sshll.u32 %s191, 4
          %s200 = int_to_ptr.vmem [resolvable:$true] %s199
          %205 = dma.hbm_to_vmem [thread:$0]  %s198, 384, %s200, %s188, 192, 192, 12
        $region36: #{tpu_custom_call.1} parent=31 // pred_fallthru
          _
      $region32: #{tpu_custom_call.1} parent=5 // pred_fallthru
        _
      %p206 = scmp.le.s32.totalorder 1, %s17
      %p207 = scmp.lt.s32.totalorder %s17, 3
      %p208 = pnand %p206, %p207
      %p209 = pneg %p208
      // Predicated region
      $region37: #{tpu_custom_call.1} parent=5 // pred_check
        _
      $region38: #{tpu_custom_call.1} parent=5 // pred_check_branch
        %211 = sbr.rel (%p208) target = $region40
      $region39: #{tpu_custom_call.1} parent=5 // pred_region
        %s212 = ssub.s32 %s17, 1
        %s213 = sand.u32 %s30, 1
        %s214 = scalar_lea.sflag [#allocation4], %s213
        %s215 = sand.u32 %s30, 1
        %s216 = smul.addr %s215, 24
        %s217 = scalar_lea.vmem [#allocation3], %s216
        // Predicated region
        $region41: #{tpu_custom_call.1} parent=39 // pred_check
          %p218 = pneg %p43
        $region42: #{tpu_custom_call.1} parent=39 // pred_check_branch
          %220 = sbr.rel (%p218) target = $region44
        $region43: #{tpu_custom_call.1} parent=39 // pred_region
          %222 = dma.done %s214, 384
        $region44: #{tpu_custom_call.1} parent=39 // pred_fallthru
          _
        %s223 = sand.u32 %s30, 1
        %s224 = scalar_lea.sflag [#allocation4], %s223
        %s225 = sand.u32 %s30, 1
        %s226 = smul.addr %s225, 24
        %s227 = scalar_lea.vmem [#allocation3], %s226
        %p228 = pneg %p43
        %p229 = pneg %p40
        %p230 = pneg %p64
        %p231 = pneg %p61
        %p232 = pneg %p85
        %p233 = pneg %p82
        %p234 = pneg %p106
        %p235 = pneg %p103
        %p236 = pneg %p127
        %p237 = pneg %p124
        %p238 = pneg %p153
        %p239 = pneg %p150
        %s240 = sand.u32 %s140, 1
        %s241 = scalar_lea.sflag [#allocation5], %s240
        %s242 = sand.u32 %s140, 1
        %s243 = smul.addr %s242, 24
        %s244 = scalar_lea.vmem [#allocation6], %s243
        %v246 = vld [vmem:[%s217] sm:$0xff]
        %v247 = vld [vmem:[%s217 + $0x8] sm:$0xf]
        %v248 = vld [vmem:[%s217 + $0xc] sm:$0xff]
        %v249 = vld [vmem:[%s217 + $0x14] sm:$0xf]
        %250 = vst [vmem:[#allocation2] sm:$0xff] %v246
        %vm251 = vcmask 257024
        %252 = vst.msk [vmem:[#allocation2 + $0x8] sm:$0xf] %vm251, %v247
        %253 = vst [vmem:[#allocation2 + $0xc] sm:$0xff] %v248
        %254 = vst.msk [vmem:[#allocation2 + $0x14] sm:$0xf] %vm251, %v249
        %259 = vrot.lane.b32.xlu0 %v246, 127
        %v260 = vpop.permute.xlu0 %259
        %261 = vrot.lane.b32.xlu0 %v247, 127
        %v262 = vpop.permute.xlu0 %261
        %263 = vrot.lane.b32.xlu0 %v248, 127
        %v264 = vpop.permute.xlu0 %263
        %265 = vrot.lane.b32.xlu0 %v249, 127
        %v266 = vpop.permute.xlu0 %265
        %v267 = vrot.slane %v260, 4
        %v268 = vrot.slane %v262, 4
        %v269 = vrot.slane %v264, 4
        %v270 = vrot.slane %v266, 4
        %vm271 = vcmask 1043456
        %v272 = vsel %vm271, %v267, %v268
        %vm273 = vcmask 1039360
        %v274 = vsel %vm273, %v260, %v272
        %v275 = vsel %vm271, %v269, %v270
        %v276 = vsel %vm273, %v264, %v275
        %281 = vst [vmem:[#allocation2 + $0x18] sm:$0xff] %v274
        %282 = vst.msk [vmem:[#allocation2 + $0x20] sm:$0xf] %vm251, %v262
        %283 = vst [vmem:[#allocation2 + $0x24] sm:$0xff] %v276
        %284 = vst.msk [vmem:[#allocation2 + $0x2c] sm:$0xf] %vm251, %v266
        %285 = vrot.lane.b32.xlu0 %v246, 126
        %v286 = vpop.permute.xlu0 %285
        %287 = vrot.lane.b32.xlu0 %v247, 126
        %v288 = vpop.permute.xlu0 %287
        %289 = vrot.lane.b32.xlu0 %v248, 126
        %v290 = vpop.permute.xlu0 %289
        %291 = vrot.lane.b32.xlu0 %v249, 126
        %v292 = vpop.permute.xlu0 %291
        %v293 = vrot.slane %v286, 4
        %v294 = vrot.slane %v288, 4
        %v295 = vrot.slane %v290, 4
        %v296 = vrot.slane %v292, 4
        %v297 = vsel %vm271, %v293, %v294
        %vm298 = vcmask 1031168
        %v299 = vsel %vm298, %v286, %v297
        %v300 = vsel %vm271, %v295, %v296
        %v301 = vsel %vm298, %v290, %v300
        %306 = vst [vmem:[#allocation2 + $0x30] sm:$0xff] %v299
        %307 = vst.msk [vmem:[#allocation2 + $0x38] sm:$0xf] %vm251, %v288
        %308 = vst [vmem:[#allocation2 + $0x3c] sm:$0xff] %v301
        %309 = vst.msk [vmem:[#allocation2 + $0x44] sm:$0xf] %vm251, %v292
        %310 = vrot.lane.b32.xlu0 %v246, 110
        %v311 = vpop.permute.xlu0 %310
        %312 = vrot.lane.b32.xlu0 %v247, 110
        %v313 = vpop.permute.xlu0 %312
        %314 = vrot.lane.b32.xlu0 %v248, 110
        %v315 = vpop.permute.xlu0 %314
        %316 = vrot.lane.b32.xlu0 %v249, 110
        %v317 = vpop.permute.xlu0 %316
        %v318 = vrot.slane %v311, 4
        %v319 = vrot.slane %v313, 4
        %v320 = vrot.slane %v315, 4
        %v321 = vrot.slane %v317, 4
        %v322 = vsel %vm271, %v318, %v319
        %vm323 = vcmask 900096
        %v324 = vsel %vm323, %v311, %v322
        %v325 = vsel %vm271, %v320, %v321
        %v326 = vsel %vm323, %v315, %v325
        %331 = vst [vmem:[#allocation2 + $0x48] sm:$0xff] %v324
        %332 = vst.msk [vmem:[#allocation2 + $0x50] sm:$0xf] %vm251, %v313
        %333 = vst [vmem:[#allocation2 + $0x54] sm:$0xff] %v326
        %334 = vst.msk [vmem:[#allocation2 + $0x5c] sm:$0xf] %vm251, %v317
        %335 = vrot.lane.b32.xlu0 %v246, 109
        %v336 = vpop.permute.xlu0 %335
        %337 = vrot.lane.b32.xlu0 %v247, 109
        %v338 = vpop.permute.xlu0 %337
        %339 = vrot.lane.b32.xlu0 %v248, 109
        %v340 = vpop.permute.xlu0 %339
        %341 = vrot.lane.b32.xlu0 %v249, 109
        %v342 = vpop.permute.xlu0 %341
        %v343 = vrot.slane %v336, 4
        %v344 = vrot.slane %v338, 4
        %v345 = vrot.slane %v340, 4
        %v346 = vrot.slane %v342, 4
        %v347 = vsel %vm271, %v343, %v344
        %vm348 = vcmask 891904
        %v349 = vsel %vm348, %v336, %v347
        %v350 = vsel %vm271, %v345, %v346
        %v351 = vsel %vm348, %v340, %v350
        %356 = vst [vmem:[#allocation2 + $0x60] sm:$0xff] %v349
        %357 = vst.msk [vmem:[#allocation2 + $0x68] sm:$0xf] %vm251, %v338
        %358 = vst [vmem:[#allocation2 + $0x6c] sm:$0xff] %v351
        %359 = vst.msk [vmem:[#allocation2 + $0x74] sm:$0xf] %vm251, %v342
        %360 = vrot.lane.b32.xlu0 %v246, 108
        %v361 = vpop.permute.xlu0 %360
        %362 = vrot.lane.b32.xlu0 %v247, 108
        %v363 = vpop.permute.xlu0 %362
        %364 = vrot.lane.b32.xlu0 %v248, 108
        %v365 = vpop.permute.xlu0 %364
        %366 = vrot.lane.b32.xlu0 %v249, 108
        %v367 = vpop.permute.xlu0 %366
        %v368 = vrot.slane %v361, 4
        %v369 = vrot.slane %v363, 4
        %v370 = vrot.slane %v365, 4
        %v371 = vrot.slane %v367, 4
        %v372 = vsel %vm271, %v368, %v369
        %vm373 = vcmask 883712
        %v374 = vsel %vm373, %v361, %v372
        %v375 = vsel %vm271, %v370, %v371
        %v376 = vsel %vm373, %v365, %v375
        %381 = vst [vmem:[#allocation2 + $0x78] sm:$0xff] %v374
        %382 = vst.msk [vmem:[#allocation2 + $0x80] sm:$0xf] %vm251, %v363
        %383 = vst [vmem:[#allocation2 + $0x84] sm:$0xff] %v376
        %384 = vst.msk [vmem:[#allocation2 + $0x8c] sm:$0xf] %vm251, %v367
        %385 = vrot.lane.b32.xlu0 %v246, 92
        %v386 = vpop.permute.xlu0 %385
        %387 = vrot.lane.b32.xlu0 %v247, 92
        %v388 = vpop.permute.xlu0 %387
        %389 = vrot.lane.b32.xlu0 %v248, 92
        %v390 = vpop.permute.xlu0 %389
        %391 = vrot.lane.b32.xlu0 %v249, 92
        %v392 = vpop.permute.xlu0 %391
        %v393 = vrot.slane %v386, 4
        %v394 = vrot.slane %v388, 4
        %v395 = vrot.slane %v390, 4
        %v396 = vrot.slane %v392, 4
        %v397 = vsel %vm271, %v393, %v394
        %vm398 = vcmask 752640
        %v399 = vsel %vm398, %v386, %v397
        %v400 = vsel %vm271, %v395, %v396
        %v401 = vsel %vm398, %v390, %v400
        %406 = vst [vmem:[#allocation2 + $0x90] sm:$0xff] %v399
        %407 = vst.msk [vmem:[#allocation2 + $0x98] sm:$0xf] %vm251, %v388
        %408 = vst [vmem:[#allocation2 + $0x9c] sm:$0xff] %v401
        %409 = vst.msk [vmem:[#allocation2 + $0xa4] sm:$0xf] %vm251, %v392
        %410 = vrot.lane.b32.xlu0 %v246, 91
        %v411 = vpop.permute.xlu0 %410
        %412 = vrot.lane.b32.xlu0 %v247, 91
        %v413 = vpop.permute.xlu0 %412
        %414 = vrot.lane.b32.xlu0 %v248, 91
        %v415 = vpop.permute.xlu0 %414
        %416 = vrot.lane.b32.xlu0 %v249, 91
        %v417 = vpop.permute.xlu0 %416
        %v418 = vrot.slane %v411, 4
        %v419 = vrot.slane %v413, 4
        %v420 = vrot.slane %v415, 4
        %v421 = vrot.slane %v417, 4
        %v422 = vsel %vm271, %v418, %v419
        %vm423 = vcmask 744448
        %v424 = vsel %vm423, %v411, %v422
        %v425 = vsel %vm271, %v420, %v421
        %v426 = vsel %vm423, %v415, %v425
        %431 = vst [vmem:[#allocation2 + $0xa8] sm:$0xff] %v424
        %432 = vst.msk [vmem:[#allocation2 + $0xb0] sm:$0xf] %vm251, %v413
        %433 = vst [vmem:[#allocation2 + $0xb4] sm:$0xff] %v426
        %434 = vst.msk [vmem:[#allocation2 + $0xbc] sm:$0xf] %vm251, %v417
        %435 = vrot.lane.b32.xlu0 %v246, 90
        %v436 = vpop.permute.xlu0 %435
        %437 = vrot.lane.b32.xlu0 %v247, 90
        %v438 = vpop.permute.xlu0 %437
        %439 = vrot.lane.b32.xlu0 %v248, 90
        %v440 = vpop.permute.xlu0 %439
        %441 = vrot.lane.b32.xlu0 %v249, 90
        %v442 = vpop.permute.xlu0 %441
        %v443 = vrot.slane %v436, 4
        %v444 = vrot.slane %v438, 4
        %v445 = vrot.slane %v440, 4
        %v446 = vrot.slane %v442, 4
        %v447 = vsel %vm271, %v443, %v444
        %vm448 = vcmask 736256
        %v449 = vsel %vm448, %v436, %v447
        %v450 = vsel %vm271, %v445, %v446
        %v451 = vsel %vm448, %v440, %v450
        %456 = vst [vmem:[#allocation2 + $0xc0] sm:$0xff] %v449
        %457 = vst.msk [vmem:[#allocation2 + $0xc8] sm:$0xf] %vm251, %v438
        %458 = vst [vmem:[#allocation2 + $0xcc] sm:$0xff] %v451
        %459 = vst.msk [vmem:[#allocation2 + $0xd4] sm:$0xf] %vm251, %v442
        %v460 = vld [vmem:[%s1] sm:$0xf]
        %v461 = vld [vmem:[#allocation2] sm:$0xff]
        %v462 = vld [vmem:[#allocation2 + $0x8] sm:$0xf]
        %v463 = vld [vmem:[#allocation2 + $0xc] sm:$0xff]
        %v464 = vld [vmem:[#allocation2 + $0x14] sm:$0xf]
        %v465 = vld [vmem:[#allocation2 + $0x18] sm:$0xff]
        %v466 = vld [vmem:[#allocation2 + $0x20] sm:$0xf]
        %v467 = vld [vmem:[#allocation2 + $0x24] sm:$0xff]
        %v468 = vld [vmem:[#allocation2 + $0x2c] sm:$0xf]
        %v469 = vld [vmem:[#allocation2 + $0x30] sm:$0xff]
        %v470 = vld [vmem:[#allocation2 + $0x38] sm:$0xf]
        %v471 = vld [vmem:[#allocation2 + $0x3c] sm:$0xff]
        %v472 = vld [vmem:[#allocation2 + $0x44] sm:$0xf]
        %v473 = vld [vmem:[#allocation2 + $0x48] sm:$0xff]
        %v474 = vld [vmem:[#allocation2 + $0x50] sm:$0xf]
        %v475 = vld [vmem:[#allocation2 + $0x54] sm:$0xff]
        %v476 = vld [vmem:[#allocation2 + $0x5c] sm:$0xf]
        %v477 = vld [vmem:[#allocation2 + $0x60] sm:$0xff]
        %v478 = vld [vmem:[#allocation2 + $0x68] sm:$0xf]
        %v479 = vld [vmem:[#allocation2 + $0x6c] sm:$0xff]
        %v480 = vld [vmem:[#allocation2 + $0x74] sm:$0xf]
        %v481 = vld [vmem:[#allocation2 + $0x78] sm:$0xff]
        %v482 = vld [vmem:[#allocation2 + $0x80] sm:$0xf]
        %v483 = vld [vmem:[#allocation2 + $0x84] sm:$0xff]
        %v484 = vld [vmem:[#allocation2 + $0x8c] sm:$0xf]
        %v485 = vld [vmem:[#allocation2 + $0x90] sm:$0xff]
        %v486 = vld [vmem:[#allocation2 + $0x98] sm:$0xf]
        %v487 = vld [vmem:[#allocation2 + $0x9c] sm:$0xff]
        %v488 = vld [vmem:[#allocation2 + $0xa4] sm:$0xf]
        %v489 = vld [vmem:[#allocation2 + $0xa8] sm:$0xff]
        %v490 = vld [vmem:[#allocation2 + $0xb0] sm:$0xf]
        %v491 = vld [vmem:[#allocation2 + $0xb4] sm:$0xff]
        %v492 = vld [vmem:[#allocation2 + $0xbc] sm:$0xf]
        %v493 = vld [vmem:[#allocation2 + $0xc0] sm:$0xff]
        %v494 = vld [vmem:[#allocation2 + $0xc8] sm:$0xf]
        %v495 = vld [vmem:[#allocation2 + $0xcc] sm:$0xff]
        %v496 = vld [vmem:[#allocation2 + $0xd4] sm:$0xf]
        %v497 = vld [vmem:[%s2] sm:$0xf]
        %499 = vset.pattern.permute.xlu0 0
        %500 = vperm.xlu0 %499, %v497
        %v501 = vpop.permute.xlu0 %500
        %504 = vst [vmem:[#allocation1] ss:$4 sm:$0xff] %v460
        %v505 = vld.sshfl [vmem:[#allocation1] sm:$0xff pattern:$0x73625140]
        %v506 = vld.sshfl [vmem:[#allocation1 + $0x8] sm:$0xff pattern:$0x73625140]
        %v544 = vunpack.c.l.b16 %v461
        %v545 = vunpack.c.h.b16 %v461
        %v546 = vunpack.c.l.b16 %v462
        %v547 = vunpack.c.l.b16 %v463
        %v548 = vunpack.c.h.b16 %v463
        %v549 = vunpack.c.l.b16 %v464
        %v550 = vunpack.c.l.b16 %v465
        %v551 = vunpack.c.h.b16 %v465
        %v552 = vunpack.c.l.b16 %v466
        %v553 = vunpack.c.l.b16 %v467
        %v554 = vunpack.c.h.b16 %v467
        %v555 = vunpack.c.l.b16 %v468
        %v556 = vunpack.c.l.b16 %v469
        %v557 = vunpack.c.h.b16 %v469
        %v558 = vunpack.c.l.b16 %v470
        %v559 = vunpack.c.l.b16 %v471
        %v560 = vunpack.c.h.b16 %v471
        %v561 = vunpack.c.l.b16 %v472
        %v562 = vunpack.c.l.b16 %v473
        %v563 = vunpack.c.h.b16 %v473
        %v564 = vunpack.c.l.b16 %v474
        %v565 = vunpack.c.l.b16 %v475
        %v566 = vunpack.c.h.b16 %v475
        %v567 = vunpack.c.l.b16 %v476
        %v568 = vunpack.c.l.b16 %v477
        %v569 = vunpack.c.h.b16 %v477
        %v570 = vunpack.c.l.b16 %v478
        %v571 = vunpack.c.l.b16 %v479
        %v572 = vunpack.c.h.b16 %v479
        %v573 = vunpack.c.l.b16 %v480
        %v574 = vunpack.c.l.b16 %v481
        %v575 = vunpack.c.h.b16 %v481
        %v576 = vunpack.c.l.b16 %v482
        %v577 = vunpack.c.l.b16 %v483
        %v578 = vunpack.c.h.b16 %v483
        %v579 = vunpack.c.l.b16 %v484
        %v580 = vunpack.c.l.b16 %v485
        %v581 = vunpack.c.h.b16 %v485
        %v582 = vunpack.c.l.b16 %v486
        %v583 = vunpack.c.l.b16 %v487
        %v584 = vunpack.c.h.b16 %v487
        %v585 = vunpack.c.l.b16 %v488
        %v586 = vunpack.c.l.b16 %v489
        %v587 = vunpack.c.h.b16 %v489
        %v588 = vunpack.c.l.b16 %v490
        %v589 = vunpack.c.l.b16 %v491
        %v590 = vunpack.c.h.b16 %v491
        %v591 = vunpack.c.l.b16 %v492
        %v592 = vunpack.c.l.b16 %v493
        %v593 = vunpack.c.h.b16 %v493
        %v594 = vunpack.c.l.b16 %v494
        %v595 = vunpack.c.l.b16 %v495
        %v596 = vunpack.c.h.b16 %v495
        %v597 = vunpack.c.l.b16 %v496
        %v598 = vpack.c.b16 %v547, %v544
        %v599 = vpack.c.b16 %v548, %v545
        %v600 = vpack.c.b16 %v549, %v546
        %v601 = vpack.c.b16 %v553, %v550
        %v602 = vpack.c.b16 %v554, %v551
        %v603 = vpack.c.b16 %v555, %v552
        %v604 = vpack.c.b16 %v559, %v556
        %v605 = vpack.c.b16 %v560, %v557
        %v606 = vpack.c.b16 %v561, %v558
        %v607 = vpack.c.b16 %v565, %v562
        %v608 = vpack.c.b16 %v566, %v563
        %v609 = vpack.c.b16 %v567, %v564
        %v610 = vpack.c.b16 %v571, %v568
        %v611 = vpack.c.b16 %v572, %v569
        %v612 = vpack.c.b16 %v573, %v570
        %v613 = vpack.c.b16 %v577, %v574
        %v614 = vpack.c.b16 %v578, %v575
        %v615 = vpack.c.b16 %v579, %v576
        %v616 = vpack.c.b16 %v583, %v580
        %v617 = vpack.c.b16 %v584, %v581
        %v618 = vpack.c.b16 %v585, %v582
        %v619 = vpack.c.b16 %v589, %v586
        %v620 = vpack.c.b16 %v590, %v587
        %v621 = vpack.c.b16 %v591, %v588
        %v622 = vpack.c.b16 %v595, %v592
        %v623 = vpack.c.b16 %v596, %v593
        %v624 = vpack.c.b16 %v597, %v594
        %vm652 = vcmask 130048
        %v653 = vsel %vm652, %v506, 0
        %655 = vmatpush.bf16.msra.mxu0 %v619
        %656 = vmatpush.bf16.msra.mxu0 %v616
        %657 = vmatpush.bf16.msra.mxu0 %v613
        %658 = vmatpush.bf16.msra.mxu0 %v610
        %659 = vmatpush.bf16.msra.mxu0 %v607
        %660 = vmatpush.bf16.msra.mxu0 %v604
        %661 = vmatpush.bf16.msra.mxu0 %v601
        %662 = vmatpush.bf16.msra.mxu0 %v598
        %663 = vmatmul.bf16.gmra.mxu0 %v505
        %v664 = vpop.f32.mrf.mxu0
        %v665 = vadd.f32 %v501, %v664
        %v666 = vpop.f32.mrf.mxu0
        %667 = vdwg.mxu0
        %668 = vmatpush.bf16.msra.mxu0 0
        %669 = vmatpush.bf16.msra.mxu0 0
        %670 = vmatpush.bf16.msra.mxu0 0
        %671 = vmatpush.bf16.msra.mxu0 0
        %672 = vmatpush.bf16.msra.mxu0 0
        %673 = vmatpush.bf16.msra.mxu0 0
        %674 = vmatpush.bf16.msra.mxu0 0
        %675 = vmatpush.bf16.msra.mxu0 %v622
        %676 = vmatmul.bf16.gmra.mxu0 %v653
        %v677 = vpop.f32.mrf.mxu0
        %v678 = vadd.f32 %v665, %v677
        %v679 = vpop.f32.mrf.mxu0
        %680 = vdwg.mxu0
        %681 = vmatpush.bf16.msra.mxu0 %v620
        %682 = vmatpush.bf16.msra.mxu0 %v617
        %683 = vmatpush.bf16.msra.mxu0 %v614
        %684 = vmatpush.bf16.msra.mxu0 %v611
        %685 = vmatpush.bf16.msra.mxu0 %v608
        %686 = vmatpush.bf16.msra.mxu0 %v605
        %687 = vmatpush.bf16.msra.mxu0 %v602
        %688 = vmatpush.bf16.msra.mxu0 %v599
        %689 = vmatmul.bf16.gmra.mxu0 %v505
        %v690 = vpop.f32.mrf.mxu0
        %v691 = vadd.f32 %v501, %v690
        %v692 = vpop.f32.mrf.mxu0
        %693 = vdwg.mxu0
        %694 = vmatpush.bf16.msra.mxu0 0
        %695 = vmatpush.bf16.msra.mxu0 0
        %696 = vmatpush.bf16.msra.mxu0 0
        %697 = vmatpush.bf16.msra.mxu0 0
        %698 = vmatpush.bf16.msra.mxu0 0
        %699 = vmatpush.bf16.msra.mxu0 0
        %700 = vmatpush.bf16.msra.mxu0 0
        %701 = vmatpush.bf16.msra.mxu0 %v623
        %702 = vmatmul.bf16.gmra.mxu0 %v653
        %v703 = vpop.f32.mrf.mxu0
        %v704 = vadd.f32 %v691, %v703
        %v705 = vpop.f32.mrf.mxu0
        %706 = vdwg.mxu0
        %707 = vmatpush.bf16.msra.mxu0 %v621
        %708 = vmatpush.bf16.msra.mxu0 %v618
        %709 = vmatpush.bf16.msra.mxu0 %v615
        %710 = vmatpush.bf16.msra.mxu0 %v612
        %711 = vmatpush.bf16.msra.mxu0 %v609
        %712 = vmatpush.bf16.msra.mxu0 %v606
        %713 = vmatpush.bf16.msra.mxu0 %v603
        %714 = vmatpush.bf16.msra.mxu0 %v600
        %715 = vmatmul.bf16.gmra.mxu0 %v505
        %v716 = vpop.f32.mrf.mxu0
        %v717 = vadd.f32 %v501, %v716
        %v718 = vpop.f32.mrf.mxu0
        %719 = vdwg.mxu0
        %720 = vmatpush.bf16.msra.mxu0 0
        %721 = vmatpush.bf16.msra.mxu0 0
        %722 = vmatpush.bf16.msra.mxu0 0
        %723 = vmatpush.bf16.msra.mxu0 0
        %724 = vmatpush.bf16.msra.mxu0 0
        %725 = vmatpush.bf16.msra.mxu0 0
        %726 = vmatpush.bf16.msra.mxu0 0
        %727 = vmatpush.bf16.msra.mxu0 %v624
        %728 = vmatmul.bf16.gmra.mxu0 %v653
        %v729 = vpop.f32.mrf.mxu0
        %v730 = vadd.f32 %v717, %v729
        %v731 = vpop.f32.mrf.mxu0
        %732 = vdwg.mxu0
        %v733 = vmax.f32 %v678, 0.0
        %v734 = vmax.f32 %v704, 0.0
        %v735 = vmax.f32 %v730, 0.0
        %v736 = vld [vmem:[%s3] sm:$0xff]
        %v737 = vld [vmem:[%s4] sm:$0xff]
        %739 = vset.pattern.permute.xlu0 0
        %740 = vperm.xlu0 %739, %v737
        %v741 = vpop.permute.xlu0 %740
        %vm743 = vcmask 31744
        %v745 = vsel %vm743, %v736, 0
        %vm747 = vcmask 1043456
        %v749 = vsel %vm747, %v733, 0
        %v752 = vsel %vm747, %v734, 0
        %v755 = vsel %vm747, %v735, 0
        %757 = vmatpush.msra.mxu0 0.0
        %758 = vmatpush.msra.mxu0 0.0
        %759 = vmatpush.msra.mxu0 0.0
        %760 = vmatpush.msra.mxu0 0.0
        %761 = vmatpush.msra.mxu0 0.0
        %762 = vmatpush.msra.mxu0 0.0
        %763 = vmatpush.msra.mxu0 0.0
        %764 = vmatpush.msra.mxu0 0.0
        %765 = vmatpush.msra.mxu0 0.0
        %766 = vmatpush.msra.mxu0 0.0
        %767 = vmatpush.msra.mxu0 0.0
        %768 = vmatpush.msra.mxu0 0.0
        %769 = vmatpush.msra.mxu0 0.0
        %770 = vmatpush.msra.mxu0 0.0
        %771 = vmatpush.msra.mxu0 0.0
        %772 = vmatpush.msra.mxu0 %v749
        %773 = vmatmul.f32.gmra.mxu0 %v745
        %v774 = vpop.f32.mrf.mxu0
        %v775 = vadd.f32 %v741, %v774
        %776 = vdwg.mxu0
        %777 = vmatpush.msra.mxu0 0.0
        %778 = vmatpush.msra.mxu0 0.0
        %779 = vmatpush.msra.mxu0 0.0
        %780 = vmatpush.msra.mxu0 0.0
        %781 = vmatpush.msra.mxu0 0.0
        %782 = vmatpush.msra.mxu0 0.0
        %783 = vmatpush.msra.mxu0 0.0
        %784 = vmatpush.msra.mxu0 0.0
        %785 = vmatpush.msra.mxu0 0.0
        %786 = vmatpush.msra.mxu0 0.0
        %787 = vmatpush.msra.mxu0 0.0
        %788 = vmatpush.msra.mxu0 0.0
        %789 = vmatpush.msra.mxu0 0.0
        %790 = vmatpush.msra.mxu0 0.0
        %791 = vmatpush.msra.mxu0 0.0
        %792 = vmatpush.msra.mxu0 %v752
        %793 = vmatmul.f32.gmra.mxu0 %v745
        %v794 = vpop.f32.mrf.mxu0
        %v795 = vadd.f32 %v741, %v794
        %796 = vdwg.mxu0
        %797 = vmatpush.msra.mxu0 0.0
        %798 = vmatpush.msra.mxu0 0.0
        %799 = vmatpush.msra.mxu0 0.0
        %800 = vmatpush.msra.mxu0 0.0
        %801 = vmatpush.msra.mxu0 0.0
        %802 = vmatpush.msra.mxu0 0.0
        %803 = vmatpush.msra.mxu0 0.0
        %804 = vmatpush.msra.mxu0 0.0
        %805 = vmatpush.msra.mxu0 0.0
        %806 = vmatpush.msra.mxu0 0.0
        %807 = vmatpush.msra.mxu0 0.0
        %808 = vmatpush.msra.mxu0 0.0
        %809 = vmatpush.msra.mxu0 0.0
        %810 = vmatpush.msra.mxu0 0.0
        %811 = vmatpush.msra.mxu0 0.0
        %812 = vmatpush.msra.mxu0 %v755
        %813 = vmatmul.f32.gmra.mxu0 %v745
        %v814 = vpop.f32.mrf.mxu0
        %v815 = vadd.f32 %v741, %v814
        %816 = vdwg.mxu0
        %817 = vst [vmem:[%s244] sm:$0xff] %v775
        %818 = vst [vmem:[%s244 + $0x8] sm:$0xff] %v795
        %vm819 = vcmask 261120
        %820 = vst.msk [vmem:[%s244 + $0x10] sm:$0xff] %vm819, %v815
        %s821 = sand.u32 %s140, 1
        %s822 = scalar_lea.sflag [#allocation5], %s821
        %s823 = sand.u32 %s140, 1
        %s824 = smul.addr %s823, 24
        %s825 = scalar_lea.vmem [#allocation6], %s824
        // Predicated region
        $region45: #{tpu_custom_call.1} parent=39 // pred_check
          %p826 = pneg %p150
        $region46: #{tpu_custom_call.1} parent=39 // pred_check_branch
          %828 = sbr.rel (%p826) target = $region48
        $region47: #{tpu_custom_call.1} parent=39 // pred_region
          %830 = vsyncadd %s822, 0
          %s831 = smul.addr %s22, 3
          %s832 = smul.addr %s831, 8
          %s833 = scalar_lea.hbm %s5, %s832
          %s835 = sshll.u32 %s825, 4
          %s836 = int_to_ptr.vmem [resolvable:$true] %s835
          %s837 = sshll.u32 %s833, 4
          %s838 = int_to_ptr.hbm [resolvable:$true] %s837
          %840 = dma.vmem_to_hbm [thread:$0]  %s836, 384, %s838, %s822
        $region48: #{tpu_custom_call.1} parent=39 // pred_fallthru
          _
      $region40: #{tpu_custom_call.1} parent=5 // pred_fallthru
        _
      %p841 = scmp.le.s32.totalorder 2, %s17
      // Predicated region
      $region49: #{tpu_custom_call.1} parent=5 // pred_check
        %p842 = pneg %p841
      $region50: #{tpu_custom_call.1} parent=5 // pred_check_branch
        %844 = sbr.rel (%p842) target = $region52
      $region51: #{tpu_custom_call.1} parent=5 // pred_region
        %s845 = ssub.s32 %s17, 2
        // Predicated region
        $region53: #{tpu_custom_call.1} parent=51 // pred_check
          %p846 = pneg %p156
        $region54: #{tpu_custom_call.1} parent=51 // pred_check_branch
          %848 = sbr.rel (%p846) target = $region56
        $region55: #{tpu_custom_call.1} parent=51 // pred_region
          %s849 = sand.u32 %s141, 1
          %s850 = scalar_lea.sflag [#allocation5], %s849
          %s851 = sand.u32 %s141, 1
          %s852 = smul.addr %s851, 24
          %s853 = scalar_lea.vmem [#allocation6], %s852
          %855 = dma.done %s850, 384
        $region56: #{tpu_custom_call.1} parent=51 // pred_fallthru
          _
      $region52: #{tpu_custom_call.1} parent=5 // pred_fallthru
        _
    $region6: #{tpu_custom_call.1} parent=1 // loop_footer
      %s21 = sadd.s32 1, %s17
    $region7: #{tpu_custom_call.1} parent=1 // loop_footer_branch
      %16 = sbr.rel target = $region3
    $region8: #{tpu_custom_call.1} parent=1 // loop_exit
      _
    %856 = vsyncpa [#allocation4], 1
    %s857 = scalar_lea.sflag [#allocation4], 1
    %858 = vsyncpa %s857, 1
    %859 = vsyncpa [#allocation5], 1
    %s860 = scalar_lea.sflag [#allocation5], 1
    %861 = vsyncpa %s860, 1

</llo_original>
